<compile_context>
chip_gen: v7x
topology: tpu7x:2x2x1
jax: 0.10.0
libtpu: 0.0.40
codegen_flags: <defaults>
</compile_context>

<pallas_src>
import functools

import jax
import jax.numpy as jnp
from jax.experimental import pallas as pl
from jax.experimental.pallas import tpu as pltpu


# ----------------------------- config ---------------------------------------
CONFIG = {
    "nn_input_dim": 16,   # forward() appends a ones column, so raw x has 15 cols
    "nn_hidden_dim": 32,
    "nn_output_dim": 8,
}
BATCH = 8


def _round_up(n, m):
    return ((n + m - 1) // m) * m


# ----------------------------- kernel ---------------------------------------
def phi2_kernel(xt_ref, ws_ref, bias_ref, w32_ref, o_ref, *, hid_dim):
    """Per-batch-tile kernel (batch on the lane axis).

    xt_ref  : (In-1, Tb)   raw input, transposed
    ws_ref  : (H+O, In-1)  stacked [W21x ; W31x]        (resident)
    bias_ref: (H+O, 1)     stacked ones-column weights  (resident)
    w32_ref : (O, H)       W32                          (resident)
    o_ref   : (O, Tb)      y^T for this tile (lane-dense store)
    """
    xt = xt_ref[...]
    # Single MXU pass over x^T for both W21 and W31; bias replaces the
    # reference's ones-column concat (VPU broadcast-add).
    r = jnp.dot(ws_ref[...], xt, preferred_element_type=jnp.float32) + bias_ref[...]
    h = jnp.maximum(r[:hid_dim, :], 0.0)      # (H, Tb); slice at sublane-aligned 32
    o_ref[...] = (
        r[hid_dim:, :]
        + jnp.dot(w32_ref[...], h, preferred_element_type=jnp.float32)
    ).astype(o_ref.dtype)


# ----------------------------- wrapper ---------------------------------------
def phi2_forward(x, varphi1, varphi2, l1_diag, l2_diag, l3_diag,
                 *, tile_b=4096, force_pallas=False):
    hid_dim, in_dim = varphi1.shape          # (32, 16)
    out_dim = varphi2.shape[0]               # 8
    b, feat = x.shape                        # feat == in_dim - 1

    # ---- parameter-only weight construction (hoisted out of the kernel) ----
    w21 = varphi1 * l1_diag[None, :] - l2_diag[:, None] * varphi1     # (H, In)
    a = l3_diag[:, None] * varphi2 - varphi2 * l2_diag[None, :]       # (O, H)
    w31 = a @ varphi1                                                 # (O, In)
    w32 = -a                                                          # (O, H)
    # Fused weight for the single x^T-contracting matmul + bias that replaces
    # the ones-column concat.
    ws = jnp.concatenate([w21[:, :feat], w31[:, :feat]], axis=0)      # (H+O, In-1)
    bias = jnp.concatenate([w21[:, feat:], w31[:, feat:]], axis=0)    # (H+O, 1)

    # ---- small-batch fast path: plain XLA, no pallas_call overhead ----------
    if not force_pallas and b < 1024:
        r = x @ ws.T + bias[:, 0]                                     # (B, H+O)
        h = jnp.maximum(r[:, :hid_dim], 0.0)
        return r[:, hid_dim:] + h @ w32.T                             # (B, O)

    # ---- batch tiling: big lane tiles toward HBM roofline, but keep >= 2
    #      grid steps whenever the batch allows so the "parallel" axis shards
    #      across both v7x TensorCores (no-op on v5e/v6e) ----------------------
    padded_b = _round_up(b, 128)
    num_tiles = max(1, -(-padded_b // tile_b))
    if padded_b >= 256:
        num_tiles = max(num_tiles, 2)
    tile_b = _round_up(-(-padded_b // num_tiles), 128)   # balanced, 128-aligned
    padded_b = tile_b * num_tiles

    # Single remaining input-layout pass: transpose + batch-pad in one
    # constructed copy (no concat, no separate pad pass).  Padded columns are
    # zero, so they only ever produce bias-valued garbage that is sliced off.
    # TODO(synk): stream x straight from HBM in its native (B, In-1) layout and
    # transpose the tile in-kernel once Mosaic's 2-D transpose handles a
    # 15-wide minor dim robustly; that removes this last wrapper HBM pass.
    if padded_b != b:
        xt = jnp.zeros((feat, padded_b), x.dtype).at[:, :b].set(x.T)
    else:
        xt = x.T                                                       # (In-1, B)

    kernel = functools.partial(phi2_kernel, hid_dim=hid_dim)
    yt = pl.pallas_call(
        kernel,
        out_shape=jax.ShapeDtypeStruct((out_dim, padded_b), jnp.float32),
        grid=(num_tiles,),
        in_specs=[
            pl.BlockSpec((feat, tile_b), lambda i: (0, i)),              # x^T tile
            pl.BlockSpec((hid_dim + out_dim, feat), lambda i: (0, 0)),   # Ws (resident)
            pl.BlockSpec((hid_dim + out_dim, 1), lambda i: (0, 0)),      # bias (resident)
            pl.BlockSpec((out_dim, hid_dim), lambda i: (0, 0)),          # W32 (resident)
        ],
        out_specs=pl.BlockSpec((out_dim, tile_b), lambda i: (0, i)),     # lane-dense
        compiler_params=pltpu.CompilerParams(
            dimension_semantics=("parallel",)),    # megacore sharding on v7x
    )(xt, ws, bias, w32)

    # Back to the module's (B, O) convention; consumers that accept (O, B)
    # could skip this final slice+transpose.
    return yt[:, :b].T


# ----------------------------- param init ------------------------------------
def xavier_uniform(key, shape):
    fan_out, fan_in = shape
    bound = (6.0 / (fan_in + fan_out)) ** 0.5
    return jax.random.uniform(key, shape, jnp.float32, -bound, bound)


def init_params(key, in_dim, hid_dim, out_dim):
    k1, k2 = jax.random.split(key)
    varphi1 = xavier_uniform(k1, (hid_dim, in_dim))
    varphi2 = xavier_uniform(k2, (out_dim, hid_dim))
    l1_diag = jnp.zeros((in_dim,), jnp.float32)   # fill_(0.0)
    l2_diag = jnp.zeros((hid_dim,), jnp.float32)  # fill_(0.0)
    l3_diag = jnp.ones((out_dim,), jnp.float32)   # fill_(1.0)
    return varphi1, varphi2, l1_diag, l2_diag, l3_diag


# ----------------------------- reference (plain JAX) --------------------------
def phi2_reference(x, varphi1, varphi2, l1_diag, l2_diag, l3_diag):
    l1 = jnp.diag(l1_diag)
    l2 = jnp.diag(l2_diag)
    l3 = jnp.diag(l3_diag)
    x = jnp.concatenate([x, jnp.ones((x.shape[0], 1), x.dtype)], axis=1)
    w21 = varphi1 @ l1 - l2 @ varphi1
    w32 = varphi2 @ l2 - l3 @ varphi2
    w31 = (l3 @ varphi2 - varphi2 @ l2) @ varphi1
    y = w31 @ x.T + w32 @ jnp.maximum(w21 @ x.T, 0.0)
    return y.T


# ----------------------------- main -------------------------------------------
if __name__ == "__main__":
    in_dim = CONFIG["nn_input_dim"]
    hid_dim = CONFIG["nn_hidden_dim"]
    out_dim = CONFIG["nn_output_dim"]

    key = jax.random.PRNGKey(0)
    k_params, k_diag, k_x1, k_x2 = jax.random.split(key, 4)

    # Torch-faithful init (l1=0, l2=0, l3=1).
    params = init_params(k_params, in_dim, hid_dim, out_dim)
    # A second, fully random parameter set so the kernel math isn't hidden by
    # the degenerate W21 == 0 that the default init produces.
    d1, d2, d3 = jax.random.split(k_diag, 3)
    params_rand = (params[0], params[1],
                   jax.random.normal(d1, (in_dim,), jnp.float32),
                   jax.random.normal(d2, (hid_dim,), jnp.float32),
                   jax.random.normal(d3, (out_dim,), jnp.float32))

    # forward() appends a ones column, so raw input has in_dim - 1 features.
    x_small = jax.random.normal(k_x1, (BATCH, in_dim - 1), jnp.float32)
    x_big = jax.random.normal(k_x2, (300, in_dim - 1), jnp.float32)

    fwd_pallas = jax.jit(functools.partial(phi2_forward, force_pallas=True))

    # 1) Pallas kernel, tiny batch (single tile).
    y = jax.block_until_ready(fwd_pallas(x_small, *params))
    assert y.shape == (BATCH, out_dim)
    assert jnp.allclose(y, phi2_reference(x_small, *params), atol=1e-5, rtol=1e-5)

    # 2) Pallas kernel, multi-tile grid (>=2 steps) with ragged batch padding,
    #    random diagonal parameters.
    y_big = jax.block_until_ready(fwd_pallas(x_big, *params_rand))
    assert y_big.shape == (300, out_dim)
    assert jnp.allclose(y_big, phi2_reference(x_big, *params_rand),
                        atol=1e-5, rtol=1e-5)

    # 3) Small-batch XLA fast path must agree as well.
    y_fast = jax.block_until_ready(jax.jit(phi2_forward)(x_small, *params))
    assert jnp.allclose(y_fast, phi2_reference(x_small, *params),
                        atol=1e-5, rtol=1e-5)

    print("KERNEL_OK")
</pallas_src>

<mosaic_0001>
module attributes {stable_mosaic.version = 11 : i64} {
  func.func @phi2_kernel(%arg0: i32, %arg1: memref<15x128xf32, #tpu.memory_space<vmem>>, %arg2: memref<40x15xf32, #tpu.memory_space<vmem>>, %arg3: memref<40x1xf32, #tpu.memory_space<vmem>>, %arg4: memref<8x32xf32, #tpu.memory_space<vmem>>, %arg5: memref<8x128xf32, #tpu.memory_space<vmem>>) attributes {dimension_semantics = [#tpu.dimension_semantics<parallel>], iteration_bounds = array<i64: 1>, scalar_prefetch = 0 : i64, scratch_operands = 0 : i64, tpu.core_type = #tpu.core_type<tc>, window_params = [{transform_indices = @transform_0, window_bounds = array<i64: 15, 128>}, {pipeline_mode = #tpu.pipeline_mode<synchronous>, transform_indices = @transform_1, window_bounds = array<i64: 40, 15>}, {pipeline_mode = #tpu.pipeline_mode<synchronous>, transform_indices = @transform_2, window_bounds = array<i64: 40, 1>}, {pipeline_mode = #tpu.pipeline_mode<synchronous>, transform_indices = @transform_3, window_bounds = array<i64: 8, 32>}, {transform_indices = @transform_4, window_bounds = array<i64: 8, 128>}]} {
    %c0 = arith.constant 0 : index
    %c0_0 = arith.constant 0 : index
    %0 = vector.load %arg1[%c0, %c0_0] : memref<15x128xf32, #tpu.memory_space<vmem>>, vector<15x128xf32>
    %c0_1 = arith.constant 0 : index
    %c0_2 = arith.constant 0 : index
    %1 = vector.load %arg2[%c0_1, %c0_2] : memref<40x15xf32, #tpu.memory_space<vmem>>, vector<40x15xf32>
    %cst = arith.constant dense<0.000000e+00> : vector<40x128xf32>
    %2 = tpu.matmul %1, %0, %cst {dimension_numbers = #tpu.dot_dimension_numbers<[1], [0], [0], [1], [0, 0, 1, 1], [], []>} : vector<40x15xf32>, vector<15x128xf32>, vector<40x128xf32> -> vector<40x128xf32>
    %c0_3 = arith.constant 0 : index
    %c0_4 = arith.constant 0 : index
    %3 = vector.load %arg3[%c0_3, %c0_4] : memref<40x1xf32, #tpu.memory_space<vmem>>, vector<40x1xf32>
    %4 = vector.broadcast %3 : vector<40x1xf32> to vector<40x128xf32>
    %5 = arith.addf %2, %4 : vector<40x128xf32>
    %6 = vector.extract_strided_slice %5 {offsets = [0, 0], sizes = [32, 128], strides = [1, 1]} : vector<40x128xf32> to vector<32x128xf32>
    %cst_5 = arith.constant 0.000000e+00 : f32
    %7 = vector.broadcast %cst_5 : f32 to vector<32x128xf32>
    %8 = arith.maximumf %6, %7 : vector<32x128xf32>
    %9 = vector.extract_strided_slice %5 {offsets = [32, 0], sizes = [8, 128], strides = [1, 1]} : vector<40x128xf32> to vector<8x128xf32>
    %c0_6 = arith.constant 0 : index
    %c0_7 = arith.constant 0 : index
    %10 = vector.load %arg4[%c0_6, %c0_7] : memref<8x32xf32, #tpu.memory_space<vmem>>, vector<8x32xf32>
    %cst_8 = arith.constant dense<0.000000e+00> : vector<8x128xf32>
    %11 = tpu.matmul %10, %8, %cst_8 {dimension_numbers = #tpu.dot_dimension_numbers<[1], [0], [0], [1], [0, 0, 1, 1], [], []>} : vector<8x32xf32>, vector<32x128xf32>, vector<8x128xf32> -> vector<8x128xf32>
    %12 = arith.addf %9, %11 : vector<8x128xf32>
    %c0_9 = arith.constant 0 : index
    %c0_10 = arith.constant 0 : index
    %13 = vector.load %arg5[%c0_9, %c0_10] : memref<8x128xf32, #tpu.memory_space<vmem>>, vector<8x128xf32>
    tpu.vector_store %arg5[%c0_9, %c0_10], %12 {strides = array<i32>} : memref<8x128xf32, #tpu.memory_space<vmem>>, vector<8x128xf32>,
    return
  }
  func.func @transform_0(%arg0: i32) -> (i32, i32) {
    %c0_i32 = arith.constant 0 : i32
    %c0_i32_0 = arith.constant 0 : i32
    return %c0_i32, %arg0 : i32, i32
  }
  func.func @transform_1(%arg0: i32) -> (i32, i32) {
    %c0_i32 = arith.constant 0 : i32
    %c0_i32_0 = arith.constant 0 : i32
    %c0_i32_1 = arith.constant 0 : i32
    return %c0_i32, %c0_i32_0 : i32, i32
  }
  func.func @transform_2(%arg0: i32) -> (i32, i32) {
    %c0_i32 = arith.constant 0 : i32
    %c0_i32_0 = arith.constant 0 : i32
    %c0_i32_1 = arith.constant 0 : i32
    return %c0_i32, %c0_i32_0 : i32, i32
  }
  func.func @transform_3(%arg0: i32) -> (i32, i32) {
    %c0_i32 = arith.constant 0 : i32
    %c0_i32_0 = arith.constant 0 : i32
    %c0_i32_1 = arith.constant 0 : i32
    return %c0_i32, %c0_i32_0 : i32, i32
  }
  func.func @transform_4(%arg0: i32) -> (i32, i32) {
    %c0_i32 = arith.constant 0 : i32
    %c0_i32_0 = arith.constant 0 : i32
    return %c0_i32, %arg0 : i32, i32
  }
}

</mosaic_0001>

<llo_original>
// kernel: phi2_forward.1
$region0: #{phi2_forward.1}
  #allocation0 [shape = 'u32[]', space=smem, size = 0x4, offset = 0x4, fixed_abs, tag = 'smem constant byte address 0x4 - core index']
  #allocation1 [shape = 'u32[144,128]{1,0:T(1,128)}', space=vmem, size = 0x12000, scoped, tag = 'internal scratch']
  %s0 = inlined_call_operand.vmem [shape: f32[15,128], index: 0, kind: input, shape index: {}]
  %s1 = inlined_call_operand.vmem [shape: f32[40,15], index: 1, kind: input, shape index: {}]
  %s2 = inlined_call_operand.vmem [shape: f32[40,1], index: 2, kind: input, shape index: {}]
  %s3 = inlined_call_operand.vmem [shape: f32[8,32], index: 3, kind: input, shape index: {}]
  %s4 = inlined_call_operand.vmem [shape: f32[8,128], index: 4, kind: output, shape index: {}]
  %s5 = sld [smem:[#allocation0]]
  $region26: #{phi2_forward.1} parent=0
    _
  %s7 = ssub.s32 1, %s5
  %s8 = scalar_select 0, %s7, %s5
  // Predicated region
  $region2: #{phi2_forward.1} parent=0 // pred_check
    _
  $region3: #{phi2_forward.1} parent=0 // pred_check_branch
    %10 = sbr.rel (0) target = $region5
  $region4: #{phi2_forward.1} parent=0 // pred_region
    _
  $region5: #{phi2_forward.1} parent=0 // pred_fallthru
    _
  // Predicated region
  $region6: #{phi2_forward.1} parent=0 // pred_check
    _
  $region7: #{phi2_forward.1} parent=0 // pred_check_branch
    %12 = sbr.rel (0) target = $region9
  $region8: #{phi2_forward.1} parent=0 // pred_region
    _
  $region9: #{phi2_forward.1} parent=0 // pred_fallthru
    _
  // Predicated region
  $region10: #{phi2_forward.1} parent=0 // pred_check
    _
  $region11: #{phi2_forward.1} parent=0 // pred_check_branch
    %14 = sbr.rel (0) target = $region13
  $region12: #{phi2_forward.1} parent=0 // pred_region
    _
  $region13: #{phi2_forward.1} parent=0 // pred_fallthru
    _
  // Predicated region
  $region14: #{phi2_forward.1} parent=0 // pred_check
    _
  $region15: #{phi2_forward.1} parent=0 // pred_check_branch
    %16 = sbr.rel (0) target = $region17
  $region16: #{phi2_forward.1} parent=0 // pred_region
    _
  $region17: #{phi2_forward.1} parent=0 // pred_fallthru
    _
  %v17 = vld [vmem:[%s0] sm:$0xff]
  %v18 = vld [vmem:[%s0 + $0x8] sm:$0x7f]
  %v19 = vld [vmem:[%s1] sm:$0xff]
  %v20 = vld [vmem:[%s1 + $0x8] sm:$0xff]
  %v21 = vld [vmem:[%s1 + $0x10] sm:$0xff]
  %v22 = vld [vmem:[%s1 + $0x18] sm:$0xff]
  %v23 = vld [vmem:[%s1 + $0x20] sm:$0xff]
  %v24 = vld [vmem:[%s2] sm:$0xff]
  %v25 = vld [vmem:[%s2 + $0x8] sm:$0xff]
  %v26 = vld [vmem:[%s2 + $0x10] sm:$0xff]
  %v27 = vld [vmem:[%s2 + $0x18] sm:$0xff]
  %v28 = vld [vmem:[%s2 + $0x20] sm:$0xff]
  %30 = vset.pattern.permute.xlu0 0
  %31 = vperm.xlu0 %30, %v24
  %v32 = vpop.permute.xlu0 %31
  %35 = vset.pattern.permute.xlu0 0
  %36 = vperm.xlu0 %35, %v25
  %v37 = vpop.permute.xlu0 %36
  %40 = vset.pattern.permute.xlu0 0
  %41 = vperm.xlu0 %40, %v26
  %v42 = vpop.permute.xlu0 %41
  %45 = vset.pattern.permute.xlu0 0
  %46 = vperm.xlu0 %45, %v27
  %v47 = vpop.permute.xlu0 %46
  %50 = vset.pattern.permute.xlu0 0
  %51 = vperm.xlu0 %50, %v28
  %v52 = vpop.permute.xlu0 %51
  %vm54 = vcmask 121856
  %v56 = vsel %vm54, %v19, 0
  %v59 = vsel %vm54, %v20, 0
  %v62 = vsel %vm54, %v21, 0
  %v65 = vsel %vm54, %v22, 0
  %v68 = vsel %vm54, %v23, 0
  %vm70 = vcmask 1046528
  %v72 = vsel %vm70, %v18, 0
  %74 = vmatprep.subr.mxu0 0.0
  %75 = vmatpush1.msra.mxu0 %v17
  %76 = vmatprep.subr.mxu0 0.0
  %77 = vmatpush1.msra.mxu0 %v72
  %78 = vmatprep.subr.mxu0 0.0
  %79 = vmatpush1.msra.mxu0 0.0
  %80 = vmatprep.subr.mxu0 0.0
  %81 = vmatpush1.msra.mxu0 0.0
  %82 = vmatprep.subr.mxu0 0.0
  %83 = vmatpush1.msra.mxu0 0.0
  %84 = vmatprep.subr.mxu0 0.0
  %85 = vmatpush1.msra.mxu0 0.0
  %86 = vmatprep.subr.mxu0 0.0
  %87 = vmatpush1.msra.mxu0 0.0
  %88 = vmatprep.subr.mxu0 0.0
  %89 = vmatpush1.msra.mxu0 0.0
  %90 = vmatprep.subr.mxu0 0.0
  %91 = vmatpush1.msra.mxu0 0.0
  %92 = vmatprep.subr.mxu0 0.0
  %93 = vmatpush1.msra.mxu0 0.0
  %94 = vmatprep.subr.mxu0 0.0
  %95 = vmatpush1.msra.mxu0 0.0
  %96 = vmatprep.subr.mxu0 0.0
  %97 = vmatpush1.msra.mxu0 0.0
  %98 = vmatprep.subr.mxu0 0.0
  %99 = vmatpush1.msra.mxu0 0.0
  %100 = vmatprep.subr.mxu0 0.0
  %101 = vmatpush1.msra.mxu0 0.0
  %102 = vmatprep.subr.mxu0 0.0
  %103 = vmatpush1.msra.mxu0 0.0
  %104 = vmatprep.subr.mxu0 0.0
  %105 = vmatpush1.msra.mxu0 0.0
  %106 = vmatprep.subr.mxu0 0.0
  %107 = vmatpush1.msra.mxu0 0.0
  %108 = vmatprep.subr.mxu0 0.0
  %109 = vmatpush1.msra.mxu0 0.0
  %110 = vmatprep.subr.mxu0 0.0
  %111 = vmatpush1.msra.mxu0 0.0
  %112 = vmatprep.subr.mxu0 0.0
  %113 = vmatpush1.msra.mxu0 0.0
  %114 = vmatprep.subr.mxu0 0.0
  %115 = vmatpush1.msra.mxu0 0.0
  %116 = vmatprep.subr.mxu0 0.0
  %117 = vmatpush1.msra.mxu0 0.0
  %118 = vmatprep.subr.mxu0 0.0
  %119 = vmatpush1.msra.mxu0 0.0
  %120 = vmatprep.subr.mxu0 0.0
  %121 = vmatpush1.msra.mxu0 0.0
  %122 = vmatprep.subr.mxu0 0.0
  %123 = vmatpush1.msra.mxu0 0.0
  %124 = vmatprep.subr.mxu0 0.0
  %125 = vmatpush1.msra.mxu0 0.0
  %126 = vmatprep.subr.mxu0 0.0
  %127 = vmatpush1.msra.mxu0 0.0
  %128 = vmatprep.subr.mxu0 0.0
  %129 = vmatpush1.msra.mxu0 0.0
  %130 = vmatprep.subr.mxu0 0.0
  %131 = vmatpush1.msra.mxu0 0.0
  %132 = vmatprep.subr.mxu0 0.0
  %133 = vmatpush1.msra.mxu0 0.0
  %134 = vmatprep.subr.mxu0 0.0
  %135 = vmatpush1.msra.mxu0 0.0
  %136 = vmatprep.subr.mxu0 0.0
  %137 = vmatpush1.msra.mxu0 0.0
  %138 = vmatprep.mubr.f32.mxu0 0.0
  %139 = vmatmul.mubr.f32.gmra.mrb[0].mxu0 %v56
  %v140 = vpop.f32.mrb[0].mxu0
  %v141 = vadd.f32 %v32, %v140
  %v142 = vpop.f32.mrb[0].mxu0
  %143 = vmatprep.mubr.f32.mxu0 0.0
  %144 = vmatmul.mubr.f32.gmra.mrb[0].mxu0 %v59
  %v145 = vpop.f32.mrb[0].mxu0
  %v146 = vadd.f32 %v37, %v145
  %v147 = vpop.f32.mrb[0].mxu0
  %148 = vmatprep.mubr.f32.mxu0 0.0
  %149 = vmatmul.mubr.f32.gmra.mrb[0].mxu0 %v62
  %v150 = vpop.f32.mrb[0].mxu0
  %v151 = vadd.f32 %v42, %v150
  %v152 = vpop.f32.mrb[0].mxu0
  %153 = vmatprep.mubr.f32.mxu0 0.0
  %154 = vmatmul.mubr.f32.gmra.mrb[0].mxu0 %v65
  %v155 = vpop.f32.mrb[0].mxu0
  %v156 = vadd.f32 %v47, %v155
  %v157 = vpop.f32.mrb[0].mxu0
  %158 = vmatprep.mubr.f32.mxu0 0.0
  %159 = vmatmul.mubr.f32.gmra.mrb[0].mxu0 %v68
  %v160 = vpop.f32.mrb[0].mxu0
  %v161 = vadd.f32 %v52, %v160
  %v162 = vpop.f32.mrb[0].mxu0
  %163 = vdwg.mxu0
  %v164 = vmax.f32 %v141, 0.0
  %v165 = vmax.f32 %v146, 0.0
  %v166 = vmax.f32 %v151, 0.0
  %v167 = vmax.f32 %v156, 0.0
  %v168 = vld [vmem:[%s3] sm:$0xff]
  %vm169 = vcmask 261120
  %v171 = vsel %vm169, %v168, 0
  %173 = vmatprep.subr.mxu0 0.0
  %174 = vmatpush1.msra.mxu0 %v164
  %175 = vmatprep.subr.mxu0 0.0
  %176 = vmatpush1.msra.mxu0 %v165
  %177 = vmatprep.subr.mxu0 0.0
  %178 = vmatpush1.msra.mxu0 %v166
  %179 = vmatprep.subr.mxu0 0.0
  %180 = vmatpush1.msra.mxu0 %v167
  %181 = vmatprep.subr.mxu0 0.0
  %182 = vmatpush1.msra.mxu0 0.0
  %183 = vmatprep.subr.mxu0 0.0
  %184 = vmatpush1.msra.mxu0 0.0
  %185 = vmatprep.subr.mxu0 0.0
  %186 = vmatpush1.msra.mxu0 0.0
  %187 = vmatprep.subr.mxu0 0.0
  %188 = vmatpush1.msra.mxu0 0.0
  %189 = vmatprep.subr.mxu0 0.0
  %190 = vmatpush1.msra.mxu0 0.0
  %191 = vmatprep.subr.mxu0 0.0
  %192 = vmatpush1.msra.mxu0 0.0
  %193 = vmatprep.subr.mxu0 0.0
  %194 = vmatpush1.msra.mxu0 0.0
  %195 = vmatprep.subr.mxu0 0.0
  %196 = vmatpush1.msra.mxu0 0.0
  %197 = vmatprep.subr.mxu0 0.0
  %198 = vmatpush1.msra.mxu0 0.0
  %199 = vmatprep.subr.mxu0 0.0
  %200 = vmatpush1.msra.mxu0 0.0
  %201 = vmatprep.subr.mxu0 0.0
  %202 = vmatpush1.msra.mxu0 0.0
  %203 = vmatprep.subr.mxu0 0.0
  %204 = vmatpush1.msra.mxu0 0.0
  %205 = vmatprep.subr.mxu0 0.0
  %206 = vmatpush1.msra.mxu0 0.0
  %207 = vmatprep.subr.mxu0 0.0
  %208 = vmatpush1.msra.mxu0 0.0
  %209 = vmatprep.subr.mxu0 0.0
  %210 = vmatpush1.msra.mxu0 0.0
  %211 = vmatprep.subr.mxu0 0.0
  %212 = vmatpush1.msra.mxu0 0.0
  %213 = vmatprep.subr.mxu0 0.0
  %214 = vmatpush1.msra.mxu0 0.0
  %215 = vmatprep.subr.mxu0 0.0
  %216 = vmatpush1.msra.mxu0 0.0
  %217 = vmatprep.subr.mxu0 0.0
  %218 = vmatpush1.msra.mxu0 0.0
  %219 = vmatprep.subr.mxu0 0.0
  %220 = vmatpush1.msra.mxu0 0.0
  %221 = vmatprep.subr.mxu0 0.0
  %222 = vmatpush1.msra.mxu0 0.0
  %223 = vmatprep.subr.mxu0 0.0
  %224 = vmatpush1.msra.mxu0 0.0
  %225 = vmatprep.subr.mxu0 0.0
  %226 = vmatpush1.msra.mxu0 0.0
  %227 = vmatprep.subr.mxu0 0.0
  %228 = vmatpush1.msra.mxu0 0.0
  %229 = vmatprep.subr.mxu0 0.0
  %230 = vmatpush1.msra.mxu0 0.0
  %231 = vmatprep.subr.mxu0 0.0
  %232 = vmatpush1.msra.mxu0 0.0
  %233 = vmatprep.subr.mxu0 0.0
  %234 = vmatpush1.msra.mxu0 0.0
  %235 = vmatprep.subr.mxu0 0.0
  %236 = vmatpush1.msra.mxu0 0.0
  %237 = vmatprep.mubr.f32.mxu0 0.0
  %238 = vmatmul.mubr.f32.gmra.mrb[0].mxu0 %v171
  %v239 = vpop.f32.mrb[0].mxu0
  %v240 = vadd.f32 0.0, %v239
  %v241 = vpop.f32.mrb[0].mxu0
  %242 = vdwg.mxu0
  %v243 = vadd.f32 %v161, %v240
  %244 = vst [vmem:[%s4] sm:$0xff] %v243
  // Predicated region
  $region18: #{phi2_forward.1} parent=0 // pred_check
    _
  $region19: #{phi2_forward.1} parent=0 // pred_check_branch
    %246 = sbr.rel (0) target = $region21
  $region20: #{phi2_forward.1} parent=0 // pred_region
    _
  $region21: #{phi2_forward.1} parent=0 // pred_fallthru
    _
  // Predicated region
  $region22: #{phi2_forward.1} parent=0 // pred_check
    _
  $region23: #{phi2_forward.1} parent=0 // pred_check_branch
    %248 = sbr.rel (0) target = $region25
  $region24: #{phi2_forward.1} parent=0 // pred_region
    _
  $region25: #{phi2_forward.1} parent=0 // pred_fallthru
    _

</llo_original>
